<compile_context>
chip_gen: v7x
topology: tpu7x:2x2x1
jax: 0.10.0
libtpu: 0.0.40
codegen_flags: <defaults>
</compile_context>

<pallas_src>
import functools
import math

import jax
import jax.numpy as jnp
from jax.experimental import pallas as pl
from jax.experimental.pallas import tpu as pltpu

# WingLoss constants (match the PyTorch __init__ defaults)
_W = 10.0
_E = 2.0
_C = _W - _W * math.log(1.0 + _W / _E)

_LANES = 128              # vreg lane width
_SUBLANES = 8             # f32 sublanes per vreg
_ROW_ALIGN = 16           # covers both f32 (8,128) and bf16 (16,128) tiles
_MAX_BLOCK_ROWS = 8192    # (8192, 128) f32 = 4 MiB per input per block
_PALLAS_MIN_ELEMENTS = 1 << 17  # below this, one fused XLA op beats a launch


def _landmarks_loss_kernel(pred_ref, true_ref, mask_ref, loss_ref, msum_ref,
                           *, total_rows, block_rows):
    p = pred_ref[...].astype(jnp.float32)
    t = true_ref[...].astype(jnp.float32)
    m = mask_ref[...].astype(jnp.float32)

    # Tail mask for the (possibly partial) last block: rows >= total_rows are
    # Pallas out-of-bounds reads with unspecified contents and must not
    # contribute to either partial sum.
    row0 = pl.program_id(0) * block_rows
    row_idx = jax.lax.broadcasted_iota(jnp.int32, p.shape, 0)
    valid = (row0 + row_idx) < total_rows

    # LandmarksLoss.forward: WingLoss(pred * mask, truel * mask)
    x = p * m
    tt = t * m

    # WingLoss.forward: weight folded into the diff, flag blend as a single
    # select; * (1/e) keeps log1p as the only EUP op per element.
    diff = jnp.where(tt == -1.0, 0.0, x - tt)
    abs_diff = jnp.abs(diff)
    # TODO(synk): if the single EUP saturates on v7x, swap log1p for a VPU
    # minimax polynomial on the clamped [0, w/e] wing domain.
    y = jnp.where(abs_diff < _W,
                  _W * jnp.log1p(abs_diff * (1.0 / _E)),
                  abs_diff - _C)

    y = jnp.where(valid, y, 0.0)
    mv = jnp.where(valid, m, 0.0)

    # Per-block (8,128) partials: the reshape keeps (8,128) tiles intact and
    # the leading-axis sum is pure vreg adds (VPU) -- no in-loop XLU reduce.
    loss_ref[0] = jnp.sum(y.reshape(-1, _SUBLANES, _LANES), axis=0)
    msum_ref[0] = jnp.sum(mv.reshape(-1, _SUBLANES, _LANES), axis=0)


def _fused_loss(pred, truel, mask):
    """Fused pure-JAX path for small inputs (single XLA elementwise fusion)."""
    x = pred.astype(jnp.float32) * mask.astype(jnp.float32)
    t = truel.astype(jnp.float32) * mask.astype(jnp.float32)
    diff = jnp.where(t == -1.0, 0.0, x - t)
    abs_diff = jnp.abs(diff)
    y = jnp.where(abs_diff < _W,
                  _W * jnp.log1p(abs_diff * (1.0 / _E)),
                  abs_diff - _C)
    return jnp.sum(y) / (jnp.sum(mask.astype(jnp.float32)) + 1e-13)


def landmarks_loss(pred, truel, mask, alpha=1.0, *,
                   max_block_rows=_MAX_BLOCK_ROWS,
                   min_pallas_elements=_PALLAS_MIN_ELEMENTS,
                   force_pallas=False):
    """JAX/Pallas equivalent of LandmarksLoss.forward(pred, truel, mask)."""
    del alpha  # stored by the PyTorch module but unused in forward
    assert pred.shape == truel.shape == mask.shape
    n = pred.size

    # Small-input fast path: landmark-sized inputs are dominated by launch
    # overhead; one fused XLA op is far cheaper.
    if n < min_pallas_elements and not force_pallas:
        return _fused_loss(pred, truel, mask)

    # bf16 pass-through (halves HBM reads); everything else runs as f32.
    if all(a.dtype == jnp.bfloat16 for a in (pred, truel, mask)):
        slab_dtype = jnp.bfloat16
        itemsize = 2
    else:
        slab_dtype = jnp.float32
        itemsize = 4
    p = pred.reshape(-1).astype(slab_dtype)
    t = truel.reshape(-1).astype(slab_dtype)
    m = mask.reshape(-1).astype(slab_dtype)

    # Lane-dense slab: (rows, 128), rows aligned only to the 16-row tile
    # boundary (pad <= 2047 elements; zero padding is exactly neutral:
    # mask=0 and log1p(0)=0).  The grid is NOT rounded up to a block
    # multiple; a partial last block is tail-masked inside the kernel.
    rows = -(-n // _LANES)
    rows = -(-rows // _ROW_ALIGN) * _ROW_ALIGN
    max_block_rows = max(_ROW_ALIGN, (max_block_rows // _ROW_ALIGN) * _ROW_ALIGN)
    block_rows = min(max_block_rows, rows)
    grid = -(-rows // block_rows)

    padded_n = rows * _LANES
    if padded_n != n:
        pad = (0, padded_n - n)
        p = jnp.pad(p, pad)
        t = jnp.pad(t, pad)
        m = jnp.pad(m, pad)

    p2 = p.reshape(rows, _LANES)
    t2 = t.reshape(rows, _LANES)
    m2 = m.reshape(rows, _LANES)

    in_spec = pl.BlockSpec((block_rows, _LANES), lambda i: (i, 0))
    out_spec = pl.BlockSpec((1, _SUBLANES, _LANES), lambda i: (i, 0, 0))
    part_shape = jax.ShapeDtypeStruct((grid, _SUBLANES, _LANES), jnp.float32)

    # Explicit scoped-VMEM budget: 3 inputs x 2 buffers x block + partials
    # + margin; 32 MiB floor / 48 MiB cap is safe on v5e/v6e (128 MiB
    # physical) and v7x (64 MiB physical per TC).
    needed = (3 * 2 * block_rows * _LANES * itemsize
              + 2 * 2 * _SUBLANES * _LANES * 4
              + (4 << 20))
    vmem_limit = int(min(max(needed, 32 << 20), 48 << 20))

    kernel = functools.partial(_landmarks_loss_kernel,
                               total_rows=rows, block_rows=block_rows)

    loss_parts, mask_parts = pl.pallas_call(
        kernel,
        grid=(grid,),
        in_specs=[in_spec, in_spec, in_spec],
        out_specs=(out_spec, out_spec),
        out_shape=(part_shape, part_shape),
        compiler_params=pltpu.CompilerParams(
            dimension_semantics=("parallel",),
            vmem_limit_bytes=vmem_limit),
    )(p2, t2, m2)

    # Tiny final cross-lane reduce + division on the partials (wrapper side).
    loss_sum = jnp.sum(loss_parts)
    mask_sum = jnp.sum(mask_parts)
    return loss_sum / (mask_sum + 1e-13)


def _reference(pred, truel, mask):
    """Pure-JAX reference mirroring the PyTorch module (flag-based blend)."""
    pred = pred.astype(jnp.float32)
    truel = truel.astype(jnp.float32)
    mask = mask.astype(jnp.float32)
    x = pred * mask
    t = truel * mask
    weight = jnp.where(t == -1.0, 0.0, 1.0)
    diff = weight * (x - t)
    abs_diff = jnp.abs(diff)
    flag = (abs_diff < _W).astype(jnp.float32)
    y = flag * _W * jnp.log(1.0 + abs_diff / _E) + (1.0 - flag) * (abs_diff - _C)
    return jnp.sum(y) / (jnp.sum(mask) + 1e-13)


def _make_inputs(key, n_targets, n_lmk, dtype=jnp.float32):
    k1, k2, k3, k4 = jax.random.split(key, 4)
    pred = jax.random.normal(k1, (n_targets, n_lmk), dtype=jnp.float32) * 5.0
    truel = jax.random.normal(k2, (n_targets, n_lmk), dtype=jnp.float32) * 5.0
    # Some targets set to -1 (ignored inside WingLoss via the weight).
    ignore = jax.random.bernoulli(k3, 0.2, (n_targets, n_lmk))
    truel = jnp.where(ignore, -1.0, truel)
    # Binary visibility mask.
    mask = jax.random.bernoulli(k4, 0.7, (n_targets, n_lmk)).astype(jnp.float32)
    return pred.astype(dtype), truel.astype(dtype), mask.astype(dtype)


if __name__ == "__main__":
    key = jax.random.PRNGKey(0)
    k_a, k_b, k_c = jax.random.split(key, 3)

    # Case 1: landmark-sized input (16, 10) -> small-input fused-JAX path.
    pred, truel, mask = _make_inputs(k_a, 16, 10)
    out_fast = jax.block_until_ready(landmarks_loss(pred, truel, mask))
    ref = _reference(pred, truel, mask)
    assert jnp.allclose(out_fast, ref, rtol=1e-5, atol=1e-5), (out_fast, ref)

    # Case 2: same input forced through the Pallas kernel
    # (single full block, pad-to-tile path).
    out_k = jax.block_until_ready(
        landmarks_loss(pred, truel, mask, force_pallas=True))
    assert jnp.allclose(out_k, ref, rtol=1e-5, atol=1e-5), (out_k, ref)

    # Case 3: misaligned input with a multi-step grid and a partial last
    # block (rows=48, block_rows=32) -> exercises the in-kernel tail mask.
    pred3, truel3, mask3 = _make_inputs(k_b, 436, 10)
    out3 = jax.block_until_ready(
        landmarks_loss(pred3, truel3, mask3, force_pallas=True,
                       max_block_rows=32))
    ref3 = _reference(pred3, truel3, mask3)
    assert jnp.allclose(out3, ref3, rtol=1e-5, atol=1e-5), (out3, ref3)

    # Case 4: bf16 inputs stay bf16 on the wire, upcast in-VMEM.
    pred4, truel4, mask4 = _make_inputs(k_c, 436, 10, dtype=jnp.bfloat16)
    out4 = jax.block_until_ready(
        landmarks_loss(pred4, truel4, mask4, force_pallas=True))
    ref4 = _reference(pred4, truel4, mask4)
    assert jnp.allclose(out4, ref4, rtol=1e-4, atol=1e-4), (out4, ref4)

    print("KERNEL_OK")
</pallas_src>

<mosaic_0001>
module attributes {stable_mosaic.version = 11 : i64} {
  func.func @_landmarks_loss_kernel(%arg0: i32, %arg1: memref<16x128xf32, #tpu.memory_space<vmem>>, %arg2: memref<16x128xf32, #tpu.memory_space<vmem>>, %arg3: memref<16x128xf32, #tpu.memory_space<vmem>>, %arg4: memref<1x8x128xf32, #tpu.memory_space<vmem>>, %arg5: memref<1x8x128xf32, #tpu.memory_space<vmem>>) attributes {dimension_semantics = [#tpu.dimension_semantics<parallel>], iteration_bounds = array<i64: 1>, scalar_prefetch = 0 : i64, scratch_operands = 0 : i64, tpu.core_type = #tpu.core_type<tc>, window_params = [{transform_indices = @transform_0, window_bounds = array<i64: 16, 128>}, {transform_indices = @transform_1, window_bounds = array<i64: 16, 128>}, {transform_indices = @transform_2, window_bounds = array<i64: 16, 128>}, {transform_indices = @transform_3, window_bounds = array<i64: 1, 8, 128>}, {transform_indices = @transform_4, window_bounds = array<i64: 1, 8, 128>}]} {
    %c0 = arith.constant 0 : index
    %c0_0 = arith.constant 0 : index
    %0 = vector.load %arg1[%c0, %c0_0] : memref<16x128xf32, #tpu.memory_space<vmem>>, vector<16x128xf32>
    %c0_1 = arith.constant 0 : index
    %c0_2 = arith.constant 0 : index
    %1 = vector.load %arg2[%c0_1, %c0_2] : memref<16x128xf32, #tpu.memory_space<vmem>>, vector<16x128xf32>
    %c0_3 = arith.constant 0 : index
    %c0_4 = arith.constant 0 : index
    %2 = vector.load %arg3[%c0_3, %c0_4] : memref<16x128xf32, #tpu.memory_space<vmem>>, vector<16x128xf32>
    %c16_i32 = arith.constant 16 : i32
    %3 = arith.muli %arg0, %c16_i32 : i32
    %4 = tpu.iota {dimensions = array<i32: 0>} : vector<16x128xi32>
    %5 = vector.broadcast %3 : i32 to vector<16x128xi32>
    %6 = arith.addi %5, %4 : vector<16x128xi32>
    %c16_i32_5 = arith.constant 16 : i32
    %7 = vector.broadcast %c16_i32_5 : i32 to vector<16x128xi32>
    %8 = arith.cmpi slt, %6, %7 : vector<16x128xi32>
    %9 = arith.mulf %0, %2 : vector<16x128xf32>
    %10 = arith.mulf %1, %2 : vector<16x128xf32>
    %cst = arith.constant -1.000000e+00 : f32
    %11 = vector.broadcast %cst : f32 to vector<16x128xf32>
    %12 = arith.cmpf oeq, %10, %11 : vector<16x128xf32>
    %13 = arith.subf %9, %10 : vector<16x128xf32>
    %cst_6 = arith.constant 0.000000e+00 : f32
    %14 = vector.broadcast %cst_6 : f32 to vector<16x128xf32>
    %15 = arith.select %12, %14, %13 : vector<16x128xi1>, vector<16x128xf32>
    %16 = math.absf %15 : vector<16x128xf32>
    %cst_7 = arith.constant 1.000000e+01 : f32
    %17 = vector.broadcast %cst_7 : f32 to vector<16x128xf32>
    %18 = arith.cmpf olt, %16, %17 : vector<16x128xf32>
    %cst_8 = arith.constant 5.000000e-01 : f32
    %19 = vector.broadcast %cst_8 : f32 to vector<16x128xf32>
    %20 = arith.mulf %16, %19 : vector<16x128xf32>
    %21 = math.log1p %20 : vector<16x128xf32>
    %cst_9 = arith.constant 1.000000e+01 : f32
    %22 = vector.broadcast %cst_9 : f32 to vector<16x128xf32>
    %23 = arith.mulf %22, %21 : vector<16x128xf32>
    %cst_10 = arith.constant -7.9175949 : f32
    %24 = vector.broadcast %cst_10 : f32 to vector<16x128xf32>
    %25 = arith.subf %16, %24 : vector<16x128xf32>
    %26 = arith.select %18, %23, %25 : vector<16x128xi1>, vector<16x128xf32>
    %cst_11 = arith.constant 0.000000e+00 : f32
    %27 = vector.broadcast %cst_11 : f32 to vector<16x128xf32>
    %28 = arith.select %8, %26, %27 : vector<16x128xi1>, vector<16x128xf32>
    %cst_12 = arith.constant 0.000000e+00 : f32
    %29 = vector.broadcast %cst_12 : f32 to vector<16x128xf32>
    %30 = arith.select %8, %2, %29 : vector<16x128xi1>, vector<16x128xf32>
    %31 = vector.shape_cast %28 : vector<16x128xf32> to vector<2x8x128xf32>
    %cst_13 = arith.constant dense<0.000000e+00> : vector<8x128xf32>
    %32 = vector.multi_reduction <add>, %31, %cst_13 [0] : vector<2x8x128xf32> to vector<8x128xf32>
    %c0_14 = arith.constant 0 : index
    %c0_15 = arith.constant 0 : index
    %c0_16 = arith.constant 0 : index
    %33 = vector.load %arg4[%c0_14, %c0_15, %c0_16] : memref<1x8x128xf32, #tpu.memory_space<vmem>>, vector<1x8x128xf32>
    %34 = vector.shape_cast %33 : vector<1x8x128xf32> to vector<8x128xf32>
    %35 = vector.shape_cast %32 : vector<8x128xf32> to vector<1x8x128xf32>
    tpu.vector_store %arg4[%c0_14, %c0_15, %c0_16], %35 {strides = array<i32>} : memref<1x8x128xf32, #tpu.memory_space<vmem>>, vector<1x8x128xf32>,
    %36 = vector.shape_cast %30 : vector<16x128xf32> to vector<2x8x128xf32>
    %cst_17 = arith.constant dense<0.000000e+00> : vector<8x128xf32>
    %37 = vector.multi_reduction <add>, %36, %cst_17 [0] : vector<2x8x128xf32> to vector<8x128xf32>
    %c0_18 = arith.constant 0 : index
    %c0_19 = arith.constant 0 : index
    %c0_20 = arith.constant 0 : index
    %38 = vector.load %arg5[%c0_18, %c0_19, %c0_20] : memref<1x8x128xf32, #tpu.memory_space<vmem>>, vector<1x8x128xf32>
    %39 = vector.shape_cast %38 : vector<1x8x128xf32> to vector<8x128xf32>
    %40 = vector.shape_cast %37 : vector<8x128xf32> to vector<1x8x128xf32>
    tpu.vector_store %arg5[%c0_18, %c0_19, %c0_20], %40 {strides = array<i32>} : memref<1x8x128xf32, #tpu.memory_space<vmem>>, vector<1x8x128xf32>,
    return
  }
  func.func @transform_0(%arg0: i32) -> (i32, i32) {
    %c0_i32 = arith.constant 0 : i32
    %c0_i32_0 = arith.constant 0 : i32
    return %arg0, %c0_i32 : i32, i32
  }
  func.func @transform_1(%arg0: i32) -> (i32, i32) {
    %c0_i32 = arith.constant 0 : i32
    %c0_i32_0 = arith.constant 0 : i32
    return %arg0, %c0_i32 : i32, i32
  }
  func.func @transform_2(%arg0: i32) -> (i32, i32) {
    %c0_i32 = arith.constant 0 : i32
    %c0_i32_0 = arith.constant 0 : i32
    return %arg0, %c0_i32 : i32, i32
  }
  func.func @transform_3(%arg0: i32) -> (i32, i32, i32) {
    %c0_i32 = arith.constant 0 : i32
    %c0_i32_0 = arith.constant 0 : i32
    %c0_i32_1 = arith.constant 0 : i32
    return %arg0, %c0_i32, %c0_i32_0 : i32, i32, i32
  }
  func.func @transform_4(%arg0: i32) -> (i32, i32, i32) {
    %c0_i32 = arith.constant 0 : i32
    %c0_i32_0 = arith.constant 0 : i32
    %c0_i32_1 = arith.constant 0 : i32
    return %arg0, %c0_i32, %c0_i32_0 : i32, i32, i32
  }
}

</mosaic_0001>

<llo_original>
// kernel: tpu_custom_call.1
$region0: #{tpu_custom_call.1}
  #allocation0 [shape = 'u32[]', space=smem, size = 0x4, offset = 0x4, fixed_abs, tag = 'smem constant byte address 0x4 - core index']
  #allocation1 [shape = 'u32[144,128]{1,0:T(1,128)}', space=vmem, size = 0x12000, scoped, tag = 'internal scratch']
  %s0 = inlined_call_operand.hbm [shape: f32[16,128], index: 0, kind: input, shape index: {}]
  %s1 = inlined_call_operand.hbm [shape: f32[16,128], index: 1, kind: input, shape index: {}]
  %s2 = inlined_call_operand.hbm [shape: f32[16,128], index: 2, kind: input, shape index: {}]
  %s3 = inlined_call_operand.hbm [shape: f32[1,8,128], index: 3, kind: output, shape index: {0}]
  %s4 = inlined_call_operand.hbm [shape: f32[1,8,128], index: 4, kind: output, shape index: {1}]
  %5 = xla_tuple %s3, %s4
  %s6 = sld [smem:[#allocation0]]
  $region42: #{tpu_custom_call.1} parent=0
    _
  %s8 = ssub.s32 1, %s6
  %s9 = scalar_select 0, %s8, %s6
  $region1: #{tpu_custom_call.1} parent=0
    #allocation2 [shape = 'u8[8192]{0}', space=vmem, size = 0x2000, scoped, tag = 'input window, operand 0, single buffered']
    #allocation3 [shape = 's32[1]{0}', space=sflag, size = 0x4, scoped, tag = 'scoped memory for tpu_custom_call.1']
    #allocation4 [shape = 's32[1]{0}', space=sflag, size = 0x4, scoped, tag = 'scoped memory for tpu_custom_call.1']
    #allocation5 [shape = 'u8[8192]{0}', space=vmem, size = 0x2000, scoped, tag = 'input window, operand 1, single buffered']
    #allocation6 [shape = 's32[1]{0}', space=sflag, size = 0x4, scoped, tag = 'scoped memory for tpu_custom_call.1']
    #allocation7 [shape = 'u8[8192]{0}', space=vmem, size = 0x2000, scoped, tag = 'input window, operand 2, single buffered']
    #allocation8 [shape = 'u8[4096]{0}', space=vmem, size = 0x1000, scoped, tag = 'output window, operand 0, single buffered']
    #allocation9 [shape = 'u8[4096]{0}', space=vmem, size = 0x1000, scoped, tag = 'output window, operand 1, single buffered']
    #allocation10 [shape = 's32[1]{0}', space=sflag, size = 0x4, scoped, tag = 'scoped memory for tpu_custom_call.1']
    %10 = vsyncpa [#allocation3], 0
    %11 = vsyncpa [#allocation6], 0
    %12 = vsyncpa [#allocation4], 0
    %13 = vsyncpa [#allocation10], 0
    // Predicated region
    $region2: #{tpu_custom_call.1} parent=1 // pred_check
      _
    $region3: #{tpu_custom_call.1} parent=1 // pred_check_branch
      %15 = sbr.rel (0) target = $region5
    $region4: #{tpu_custom_call.1} parent=1 // pred_region
      %s17 = ssub.s32 256, 256
      %18 = vsyncadd [#allocation3], %s17
      %s19 = sshll.u32 [#allocation2], 4
      %s20 = int_to_ptr.vmem [resolvable:$true] %s19
      %25 = dma.hbm_to_vmem [thread:$0]  %s0, 256, %s20, [#allocation3], 128, 128, 8
    $region5: #{tpu_custom_call.1} parent=1 // pred_fallthru
      _
    // Predicated region
    $region6: #{tpu_custom_call.1} parent=1 // pred_check
      _
    $region7: #{tpu_custom_call.1} parent=1 // pred_check_branch
      %27 = sbr.rel (0) target = $region9
    $region8: #{tpu_custom_call.1} parent=1 // pred_region
      %s29 = ssub.s32 256, 256
      %30 = vsyncadd [#allocation6], %s29
      %s31 = sshll.u32 [#allocation5], 4
      %s32 = int_to_ptr.vmem [resolvable:$true] %s31
      %37 = dma.hbm_to_vmem [thread:$0]  %s1, 256, %s32, [#allocation6], 128, 128, 8
    $region9: #{tpu_custom_call.1} parent=1 // pred_fallthru
      _
    // Predicated region
    $region10: #{tpu_custom_call.1} parent=1 // pred_check
      _
    $region11: #{tpu_custom_call.1} parent=1 // pred_check_branch
      %39 = sbr.rel (0) target = $region13
    $region12: #{tpu_custom_call.1} parent=1 // pred_region
      %s41 = ssub.s32 256, 256
      %42 = vsyncadd [#allocation6], %s41
      %s43 = sshll.u32 [#allocation7], 4
      %s44 = int_to_ptr.vmem [resolvable:$true] %s43
      %49 = dma.hbm_to_vmem [thread:$0]  %s2, 256, %s44, [#allocation6], 128, 128, 8
    $region13: #{tpu_custom_call.1} parent=1 // pred_fallthru
      _
    // Predicated region
    $region14: #{tpu_custom_call.1} parent=1 // pred_check
      _
    $region15: #{tpu_custom_call.1} parent=1 // pred_check_branch
      %51 = sbr.rel (0) target = $region17
    $region16: #{tpu_custom_call.1} parent=1 // pred_region
      %52 = dma.done [#allocation3], 256
    $region17: #{tpu_custom_call.1} parent=1 // pred_fallthru
      _
    // Predicated region
    $region18: #{tpu_custom_call.1} parent=1 // pred_check
      _
    $region19: #{tpu_custom_call.1} parent=1 // pred_check_branch
      %54 = sbr.rel (0) target = $region21
    $region20: #{tpu_custom_call.1} parent=1 // pred_region
      %55 = dma.done [#allocation6], 256
    $region21: #{tpu_custom_call.1} parent=1 // pred_fallthru
      _
    // Predicated region
    $region22: #{tpu_custom_call.1} parent=1 // pred_check
      _
    $region23: #{tpu_custom_call.1} parent=1 // pred_check_branch
      %57 = sbr.rel (0) target = $region25
    $region24: #{tpu_custom_call.1} parent=1 // pred_region
      %58 = dma.done [#allocation6], 256
    $region25: #{tpu_custom_call.1} parent=1 // pred_fallthru
      _
    %v59 = vld [vmem:[#allocation2] sm:$0xff]
    %v60 = vld [vmem:[#allocation2 + $0x8] sm:$0xff]
    %v61 = vld [vmem:[#allocation5] sm:$0xff]
    %v62 = vld [vmem:[#allocation5 + $0x8] sm:$0xff]
    %v63 = vld [vmem:[#allocation7] sm:$0xff]
    %v64 = vld [vmem:[#allocation7 + $0x8] sm:$0xff]
    %s65 = smul.u32 0, 16
    %v66 = vlaneseq
    %v67 = vshrl.u32 %v66, 7
    %v68 = vadd.s32 %v67, 8
    %v69 = vstv %s65
    %v70 = vadd.s32 %v69, %v67
    %v71 = vadd.s32 %v69, %v68
    %vm72 = vcmp.lt.s32.totalorder %v70, 16
    %vm73 = vcmp.lt.s32.totalorder %v71, 16
    %v74 = vmul.f32 %v59, %v63
    %v75 = vmul.f32 %v60, %v64
    %v76 = vmul.f32 %v61, %v63
    %v77 = vmul.f32 %v62, %v64
    %vm78 = vcmp.eq.f32.partialorder %v76, -1.0
    %vm79 = vcmp.eq.f32.partialorder %v77, -1.0
    %v80 = vsub.f32 %v74, %v76
    %v81 = vsub.f32 %v75, %v77
    %v82 = vsel %vm78, 0.0, %v80
    %v83 = vsel %vm79, 0.0, %v81
    %v84 = vand.u32 2147483647, %v82
    %v85 = vand.u32 2147483647, %v83
    %vm86 = vcmp.lt.f32.partialorder %v84, 10.0
    %vm87 = vcmp.lt.f32.partialorder %v85, 10.0
    %v88 = vmul.f32 %v84, 0.5
    %v89 = vmul.f32 %v85, 0.5
    %v90 = vadd.f32 %v88, 1.0
    %v91 = vlog2.pop %v90
    %v92 = vmul.f32 %v91, 0.6931472
    %v93 = vmul.f32 -0.5, %v88
    %v94 = vadd.f32 %v93, 1.0
    %v95 = vmul.f32 %v94, %v88
    %v96 = vand.u32 2147483647, %v88
    %vm97 = vcmp.lt.f32.partialorder %v96, 0.0004427343
    %v98 = vsel %vm97, %v95, %v92
    %v99 = vadd.f32 %v89, 1.0
    %v100 = vlog2.pop %v99
    %v101 = vmul.f32 %v100, 0.6931472
    %v102 = vmul.f32 -0.5, %v89
    %v103 = vadd.f32 %v102, 1.0
    %v104 = vmul.f32 %v103, %v89
    %v105 = vand.u32 2147483647, %v89
    %vm106 = vcmp.lt.f32.partialorder %v105, 0.0004427343
    %v107 = vsel %vm106, %v104, %v101
    %v108 = vmul.f32 %v98, 10.0
    %v109 = vmul.f32 %v107, 10.0
    %v110 = vsub.f32 %v84, -7.917595
    %v111 = vsub.f32 %v85, -7.917595
    %v112 = vsel %vm86, %v108, %v110
    %v113 = vsel %vm87, %v109, %v111
    %v114 = vsel %vm72, %v112, 0.0
    %v115 = vsel %vm73, %v113, 0.0
    %v116 = vsel %vm72, %v63, 0.0
    %v117 = vsel %vm73, %v64, 0.0
    %v118 = vadd.f32 %v114, %v115
    %119 = vst [vmem:[#allocation8] sm:$0xff] %v118
    %v120 = vadd.f32 %v116, %v117
    %121 = vst [vmem:[#allocation9] sm:$0xff] %v120
    // Predicated region
    $region26: #{tpu_custom_call.1} parent=1 // pred_check
      _
    $region27: #{tpu_custom_call.1} parent=1 // pred_check_branch
      %123 = sbr.rel (0) target = $region29
    $region28: #{tpu_custom_call.1} parent=1 // pred_region
      %s125 = ssub.s32 128, 128
      %126 = vsyncadd [#allocation4], %s125
      %s128 = sshll.u32 [#allocation8], 4
      %s129 = int_to_ptr.vmem [resolvable:$true] %s128
      %131 = dma.vmem_to_hbm [thread:$0]  %s129, 128, %s3, [#allocation4]
    $region29: #{tpu_custom_call.1} parent=1 // pred_fallthru
      _
    // Predicated region
    $region30: #{tpu_custom_call.1} parent=1 // pred_check
      _
    $region31: #{tpu_custom_call.1} parent=1 // pred_check_branch
      %133 = sbr.rel (0) target = $region33
    $region32: #{tpu_custom_call.1} parent=1 // pred_region
      %s135 = ssub.s32 128, 128
      %136 = vsyncadd [#allocation10], %s135
      %s138 = sshll.u32 [#allocation9], 4
      %s139 = int_to_ptr.vmem [resolvable:$true] %s138
      %141 = dma.vmem_to_hbm [thread:$0]  %s139, 128, %s4, [#allocation10]
    $region33: #{tpu_custom_call.1} parent=1 // pred_fallthru
      _
    // Predicated region
    $region34: #{tpu_custom_call.1} parent=1 // pred_check
      _
    $region35: #{tpu_custom_call.1} parent=1 // pred_check_branch
      %143 = sbr.rel (0) target = $region37
    $region36: #{tpu_custom_call.1} parent=1 // pred_region
      %144 = dma.done [#allocation4], 128
    $region37: #{tpu_custom_call.1} parent=1 // pred_fallthru
      _
    // Predicated region
    $region38: #{tpu_custom_call.1} parent=1 // pred_check
      _
    $region39: #{tpu_custom_call.1} parent=1 // pred_check_branch
      %146 = sbr.rel (0) target = $region41
    $region40: #{tpu_custom_call.1} parent=1 // pred_region
      %147 = dma.done [#allocation10], 128
    $region41: #{tpu_custom_call.1} parent=1 // pred_fallthru
      _
    %148 = vsyncpa [#allocation3], 1
    %149 = vsyncpa [#allocation6], 1
    %150 = vsyncpa [#allocation4], 1
    %151 = vsyncpa [#allocation10], 1

</llo_original>
